<compile_context>
chip_gen: v5e
topology: v5e:2x2
jax: 0.10.0
libtpu: 0.0.40
codegen_flags: <defaults>
</compile_context>

<pallas_src>
import jax
import jax.numpy as jnp
from jax import lax
from jax.experimental import pallas as pl
from jax.experimental.pallas import tpu as pltpu


def _make_kernel(nw, kaug, nout, ny, nx, out_w):
    """Fused kernel for static shapes.

    Input slab rows (single VMEM ref, lane width = max(kaug, nx)):
      [0 : nw]                         w augmented with a ones-column  (nw, kaug)
      [nw : nw+nout]                   weight rows (un-transposed) with bias col (nout, kaug)
      [nw+nout : nw+nout+1]            x as a single row               (1, nx)
      [nw+nout+1 : nw+nout+1+ny]       y                               (ny, nx)
      [nw+nout+1+ny : nw+nout+1+2*ny]  z reshaped row-major            (ny, nx)
    Output block (ny+nw, out_w):
      rows [0:ny]       = x3 as (ny, nx)   (row-major == flatten order)
      rows [ny:ny+nw]   = x1 in cols [0:nout], zero-padded to out_w
    """

    def kernel(a_ref, o_ref):
        # ---- x1 = [w | 1] @ [weight | bias]^T  (bias folded into contraction) ----
        w_aug = a_ref[0:nw, 0:kaug]                           # (nw, kaug)
        wt_aug = a_ref[nw:nw + nout, 0:kaug]                  # (nout, kaug), NOT transposed
        x1 = lax.dot_general(
            w_aug, wt_aug, (((1,), (1,)), ((), ())),
            preferred_element_type=jnp.float32,
        )                                                     # (nw, nout)

        # ---- x3 = (x + y).flatten() + z, computed as a (ny, nx) elementwise add ----
        r0 = nw + nout
        xrow = a_ref[r0:r0 + 1, 0:nx]                         # (1, nx), broadcasts over rows
        yblk = a_ref[r0 + 1:r0 + 1 + ny, 0:nx]                # (ny, nx)
        zblk = a_ref[r0 + 1 + ny:r0 + 1 + 2 * ny, 0:nx]       # (ny, nx)
        x3 = xrow + yblk + zblk                               # (ny, nx)

        # ---- compose the full output block in registers; one unmasked store ----
        if out_w != nx:
            x3 = jnp.concatenate(
                [x3, jnp.zeros((ny, out_w - nx), jnp.float32)], axis=1)
        if out_w != nout:
            x1 = jnp.concatenate(
                [x1, jnp.zeros((nw, out_w - nout), jnp.float32)], axis=1)
        o_ref[...] = jnp.concatenate([x3, x1], axis=0)        # (ny+nw, out_w)

    return kernel


@jax.jit
def _forward_branch(w, x, y, z, weight, bias):
    nw, kin = w.shape           # (6, 5)
    nout = weight.shape[0]      # 3
    ny, nx = y.shape            # (8, 4)
    assert z.size == ny * nx, "z must have y.size elements (flatten-add)"
    assert x.shape[0] == nx, "x must broadcast over y's rows"

    kaug = kin + 1              # ones/bias column appended
    width = max(kaug, nx)       # common lane width of the single input slab
    out_w = max(nx, nout)       # lane width of the single output block
    f32 = jnp.float32

    def pad_cols(m, target):
        p = target - m.shape[1]
        return m if p == 0 else jnp.pad(m, ((0, 0), (0, p)))

    # Bias folded into the contraction: [w | 1] @ [weight | bias]^T.
    w_aug = jnp.concatenate([w.astype(f32), jnp.ones((nw, 1), f32)], axis=1)
    wt_aug = jnp.concatenate(
        [weight.astype(f32), bias.astype(f32).reshape(nout, 1)], axis=1)

    # ONE input slab -> one entry DMA (packing fuses inside this jit).
    slab = jnp.concatenate(
        [pad_cols(w_aug, width),
         pad_cols(wt_aug, width),
         pad_cols(x.reshape(1, nx).astype(f32), width),
         pad_cols(y.astype(f32), width),
         pad_cols(z.reshape(ny, nx).astype(f32), width)],
        axis=0)                                               # (nw+nout+1+2*ny, width)

    flops = 2 * nw * kaug * nout + 2 * ny * nx
    bytes_accessed = 4 * (slab.size + (ny + nw) * out_w)
    vmem = pltpu.MemorySpace.VMEM

    out = pl.pallas_call(
        _make_kernel(nw, kaug, nout, ny, nx, out_w),
        out_shape=jax.ShapeDtypeStruct((ny + nw, out_w), f32),
        in_specs=[pl.BlockSpec(memory_space=vmem)],
        out_specs=pl.BlockSpec(memory_space=vmem),
        cost_estimate=pl.CostEstimate(
            flops=flops, transcendentals=0, bytes_accessed=bytes_accessed),
    )(slab)

    x3 = out[0:ny, 0:nx].reshape(-1)          # (ny*nx,) == (32,)
    x1 = out[ny:ny + nw, 0:nout]              # (nw, nout) == (6, 3)
    return x1, x3


def dynamic_model_forward(w, x, y, z, weight, bias):
    """JAX/Pallas equivalent of DynamicModel.forward.

    weight: (3, 5) float32, bias: (3,) float32 — the nn.Linear(5, 3) params.
    """
    # Static shape checks mirroring the PyTorch assertions / trace-time branch.
    assert w.shape[0] <= 512
    assert x.shape[0] >= 4
    if w.shape[0] != x.shape[0] + 2:
        return w
    return _forward_branch(w, x, y, z, weight, bias)


if __name__ == "__main__":
    key = jax.random.PRNGKey(0)
    k_w, k_x, k_y, k_z, k_wt, k_b = jax.random.split(key, 6)

    # Inputs consistent with the tutorial's example tensors.
    w = jax.random.normal(k_w, (6, 5), dtype=jnp.float32)
    x = jax.random.normal(k_x, (4,), dtype=jnp.float32)
    y = jax.random.normal(k_y, (8, 4), dtype=jnp.float32)
    z = jax.random.normal(k_z, (32,), dtype=jnp.float32)

    # Deterministic nn.Linear(5, 3) parameters.
    weight = jax.random.normal(k_wt, (3, 5), dtype=jnp.float32) * 0.1
    bias = jax.random.normal(k_b, (3,), dtype=jnp.float32) * 0.1

    x1, x3 = dynamic_model_forward(w, x, y, z, weight, bias)
    jax.block_until_ready((x1, x3))

    # Reference check in plain JAX.
    ref_x1 = w @ weight.T + bias
    ref_x3 = (x + y).reshape(-1) + z
    assert x1.shape == (6, 3) and x3.shape == (32,)
    assert jnp.allclose(x1, ref_x1, atol=1e-5)
    assert jnp.allclose(x3, ref_x3, atol=1e-5)

    print("KERNEL_OK")
</pallas_src>

<mosaic_0001>
module attributes {stable_mosaic.version = 11 : i64} {
  func.func @kernel(%arg0: memref<26x6xf32, #tpu.memory_space<vmem>>, %arg1: memref<14x4xf32, #tpu.memory_space<vmem>>) attributes {dimension_semantics = [], scalar_prefetch = 0 : i64, scratch_operands = 0 : i64, tpu.core_type = #tpu.core_type<tc>} {
    %c0 = arith.constant 0 : index
    %c0_0 = arith.constant 0 : index
    %0 = vector.load %arg0[%c0, %c0_0] : memref<26x6xf32, #tpu.memory_space<vmem>>, vector<6x6xf32>
    %c6 = arith.constant 6 : index
    %c0_1 = arith.constant 0 : index
    %1 = vector.load %arg0[%c6, %c0_1] : memref<26x6xf32, #tpu.memory_space<vmem>>, vector<3x6xf32>
    %cst = arith.constant dense<0.000000e+00> : vector<6x3xf32>
    %2 = tpu.matmul %0, %1, %cst {dimension_numbers = #tpu.dot_dimension_numbers<[1], [1], [0], [0], [0, 0, 1, 0], [], []>} : vector<6x6xf32>, vector<3x6xf32>, vector<6x3xf32> -> vector<6x3xf32>
    %c9 = arith.constant 9 : index
    %c0_2 = arith.constant 0 : index
    %3 = vector.load %arg0[%c9, %c0_2] : memref<26x6xf32, #tpu.memory_space<vmem>>, vector<1x4xf32>
    %c10 = arith.constant 10 : index
    %c0_3 = arith.constant 0 : index
    %4 = vector.load %arg0[%c10, %c0_3] : memref<26x6xf32, #tpu.memory_space<vmem>>, vector<8x4xf32>
    %c18 = arith.constant 18 : index
    %c0_4 = arith.constant 0 : index
    %5 = vector.load %arg0[%c18, %c0_4] : memref<26x6xf32, #tpu.memory_space<vmem>>, vector<8x4xf32>
    %6 = vector.broadcast %3 : vector<1x4xf32> to vector<8x4xf32>
    %7 = arith.addf %6, %4 : vector<8x4xf32>
    %8 = arith.addf %7, %5 : vector<8x4xf32>
    %cst_5 = arith.constant 0.000000e+00 : f32
    %9 = vector.broadcast %cst_5 : f32 to vector<6x1xf32>
    %10 = tpu.concatenate %2, %9 in 1 : vector<6x3xf32>, vector<6x1xf32> -> vector<6x4xf32>
    %11 = tpu.concatenate %8, %10 in 0 : vector<8x4xf32>, vector<6x4xf32> -> vector<14x4xf32>
    %c0_6 = arith.constant 0 : index
    %c0_7 = arith.constant 0 : index
    %12 = vector.load %arg1[%c0_6, %c0_7] : memref<14x4xf32, #tpu.memory_space<vmem>>, vector<14x4xf32>
    tpu.vector_store %arg1[%c0_6, %c0_7], %11 {strides = array<i32>} : memref<14x4xf32, #tpu.memory_space<vmem>>, vector<14x4xf32>,
    return
  }
}

</mosaic_0001>

<llo_original>
// kernel: _forward_branch.1
$region0: #{_forward_branch.1}
  #allocation0 [shape = 'u32[]', space=smem, size = 0x4, offset = 0x4, fixed_abs, tag = 'smem constant byte address 0x4 - core index']
  #allocation1 [shape = 'u32[72,128]{1,0:T(1,128)}', space=vmem, size = 0x9000, scoped, tag = 'internal scratch']
  %s0 = inlined_call_operand.vmem [shape: f32[26,6], index: 0, kind: input, shape index: {}]
  %s1 = inlined_call_operand.vmem [shape: f32[14,4], index: 1, kind: output, shape index: {}]
  %s2 = sld [smem:[#allocation0]]
  $region14: #{_forward_branch.1} parent=0
    _
  %s4 = ssub.s32 1, %s2
  %s5 = scalar_select 0, %s4, %s2
  // Predicated region
  $region2: #{_forward_branch.1} parent=0 // pred_check
    _
  $region3: #{_forward_branch.1} parent=0 // pred_check_branch
    %7 = sbr.rel (0) target = $region5
  $region4: #{_forward_branch.1} parent=0 // pred_region
    _
  $region5: #{_forward_branch.1} parent=0 // pred_fallthru
    _
  %v8 = vld [vmem:[%s0] sm:$0x3f]
  %v9 = vld [vmem:[%s0 + $0x6] sm:$0x7]
  %vm10 = vcmask 48128
  %v12 = vsel %vm10, %v8, 0
  %v15 = vsel %vm10, %v9, 0
  %17 = vmatpush.xpose.msra.mxu0 0.0
  %18 = vmatpush.xpose.msra.mxu0 0.0
  %19 = vmatpush.xpose.msra.mxu0 0.0
  %20 = vmatpush.xpose.msra.mxu0 0.0
  %21 = vmatpush.xpose.msra.mxu0 0.0
  %22 = vmatpush.xpose.msra.mxu0 0.0
  %23 = vmatpush.xpose.msra.mxu0 0.0
  %24 = vmatpush.xpose.msra.mxu0 0.0
  %25 = vmatpush.xpose.msra.mxu0 0.0
  %26 = vmatpush.xpose.msra.mxu0 0.0
  %27 = vmatpush.xpose.msra.mxu0 0.0
  %28 = vmatpush.xpose.msra.mxu0 0.0
  %29 = vmatpush.xpose.msra.mxu0 0.0
  %30 = vmatpush.xpose.msra.mxu0 0.0
  %31 = vmatpush.xpose.msra.mxu0 0.0
  %32 = vmatpush.xpose.msra.mxu0 %v15
  %33 = vmatmul.f32.gmra.mxu0 %v12
  %v34 = vpop.f32.mrf.mxu0
  %v35 = vadd.f32 0.0, %v34
  %36 = vdwg.mxu0
  %v37 = vld [vmem:[%s0 + $0x9] sm:$0x1]
  %v38 = vld [vmem:[%s0 + $0xa] sm:$0xff]
  %v39 = vld [vmem:[%s0 + $0x12] sm:$0xff]
  %v40 = vperm.slane %v37, 0
  %v41 = vadd.f32 %v40, %v38
  %v42 = vadd.f32 %v41, %v39
  %vm43 = vcmask 23552
  %v44 = vsel %vm43, %v35, 0.0
  %vm45 = vcmask 31744
  %46 = vst.msk [vmem:[%s1] sm:$0xff] %vm45, %v42
  %vm47 = vcmask 29696
  %48 = vst.msk [vmem:[%s1 + $0x8] sm:$0x3f] %vm47, %v44
  // Predicated region
  $region6: #{_forward_branch.1} parent=0 // pred_check
    _
  $region7: #{_forward_branch.1} parent=0 // pred_check_branch
    %50 = sbr.rel (0) target = $region9
  $region8: #{_forward_branch.1} parent=0 // pred_region
    _
  $region9: #{_forward_branch.1} parent=0 // pred_fallthru
    _
  // Predicated region
  $region10: #{_forward_branch.1} parent=0 // pred_check
    _
  $region11: #{_forward_branch.1} parent=0 // pred_check_branch
    %52 = sbr.rel (0) target = $region13
  $region12: #{_forward_branch.1} parent=0 // pred_region
    _
  $region13: #{_forward_branch.1} parent=0 // pred_fallthru
    _

</llo_original>
